<compile_context>
chip_gen: v7x
topology: tpu7x:2x2x1
jax: 0.10.0
libtpu: 0.0.40
codegen_flags: <defaults>
</compile_context>

<pallas_src>
import functools

import jax
import jax.numpy as jnp
from jax.experimental import pallas as pl
from jax.experimental.pallas import tpu as pltpu

K_IN = 784          # fc1 in_features (unpadded -- equals full last dim of x)
H = 128             # fc1 out_features / fc2 in_features
N_OUT = 10          # fc2 out_features (logical)
N_PAD = 128         # lane-dense output width


def _round_up(x, m):
    return ((x + m - 1) // m) * m


def _mlp_kernel(x_ref, w1_ref, b1_ref, w2_ref, b2_ref, o_ref):
    # Cast the f32 activation tile to bf16 in-kernel (VPU work, hidden under
    # the x-tile DMA); both matmuls are bf16 x bf16 with f32 MXU accumulation.
    x_bf = x_ref[...].astype(jnp.bfloat16)                        # (TM, 784)
    h = jnp.dot(x_bf, w1_ref[...], preferred_element_type=jnp.float32)
    h = jnp.maximum(h + b1_ref[...], 0.0)                         # bias+relu in f32
    out = jnp.dot(h.astype(jnp.bfloat16), w2_ref[...],
                  preferred_element_type=jnp.float32)
    o_ref[...] = (out + b2_ref[...]).astype(o_ref.dtype)          # (TM, 128) bf16


@functools.partial(jax.jit, static_argnames=("tm",))
def mymodel_forward(x, w1, b1, w2, b2, *, tm=1024):
    """x: any shape whose trailing dims flatten to 784. Returns (batch, 10) f32."""
    x2d = x.reshape(-1, K_IN).astype(jnp.float32)     # torch's x.view(-1, 784)
    batch = x2d.shape[0]

    # --- batch tile: TM rows per grid step (static under jit) ---
    TM = min(tm, _round_up(batch, 8))
    # v7x: for non-tiny batches make sure the "parallel" axis has >= 2 steps
    # so the work actually splits across both TensorCores.
    if batch > 16 and pl.cdiv(batch, TM) < 2:
        TM = _round_up(pl.cdiv(batch, 2), 8)
    grid = (pl.cdiv(batch, TM),)          # natural partial trailing block

    # Weights / biases: bf16 weights, f32 biases; only fc2's N padded to 128.
    w1_bf = w1.astype(jnp.bfloat16)                                  # (784, 128)
    b1_f = b1.astype(jnp.float32).reshape(1, H)                      # (1, 128)
    w2_p = jnp.zeros((H, N_PAD), jnp.bfloat16).at[:, :N_OUT].set(
        w2.astype(jnp.bfloat16))                                     # (128, 128)
    b2_p = jnp.zeros((1, N_PAD), jnp.float32).at[0, :N_OUT].set(
        b2.astype(jnp.float32))                                      # (1, 128)

    cost = pl.CostEstimate(
        flops=batch * (2 * K_IN * H + 2 * H * N_PAD),
        transcendentals=0,
        bytes_accessed=(batch * K_IN * 4                 # x read (f32)
                        + K_IN * H * 2 + H * N_PAD * 2   # weights (bf16)
                        + (H + N_PAD) * 4                # biases (f32)
                        + batch * N_PAD * 2),            # output (bf16)
    )

    out = pl.pallas_call(
        _mlp_kernel,
        out_shape=jax.ShapeDtypeStruct((batch, N_PAD), jnp.bfloat16),
        grid_spec=pl.GridSpec(
            grid=grid,
            in_specs=[
                pl.BlockSpec((TM, K_IN), lambda i: (i, 0)),   # x tile (pipelined)
                pl.BlockSpec((K_IN, H), lambda i: (0, 0)),    # w1 (resident)
                pl.BlockSpec((1, H), lambda i: (0, 0)),       # b1 (resident)
                pl.BlockSpec((H, N_PAD), lambda i: (0, 0)),   # w2 (resident)
                pl.BlockSpec((1, N_PAD), lambda i: (0, 0)),   # b2 (resident)
            ],
            out_specs=pl.BlockSpec((TM, N_PAD), lambda i: (i, 0)),
        ),
        compiler_params=pltpu.CompilerParams(
            dimension_semantics=("parallel",),
            vmem_limit_bytes=32 * 1024 * 1024),  # headroom for v5e's 16 MiB default
        cost_estimate=cost,
    )(x2d, w1_bf, b1_f, w2_p, b2_p)

    # drop padded lanes; return f32 logits to match the PyTorch module
    return out[:, :N_OUT].astype(jnp.float32)


def init_params(key, dtype=jnp.float32):
    """Deterministic init matching nn.Linear's U(-1/sqrt(fan_in), 1/sqrt(fan_in))."""
    k1, k2, k3, k4 = jax.random.split(key, 4)
    bound1 = 1.0 / jnp.sqrt(784.0)
    bound2 = 1.0 / jnp.sqrt(128.0)
    # stored as [in_features, out_features] (transposed vs. PyTorch weight)
    w1 = jax.random.uniform(k1, (K_IN, H), dtype, -bound1, bound1)
    b1 = jax.random.uniform(k2, (H,), dtype, -bound1, bound1)
    w2 = jax.random.uniform(k3, (H, N_OUT), dtype, -bound2, bound2)
    b2 = jax.random.uniform(k4, (N_OUT,), dtype, -bound2, bound2)
    return w1, b1, w2, b2


if __name__ == "__main__":
    key = jax.random.PRNGKey(0)
    pkey, xkey = jax.random.split(key)
    w1, b1, w2, b2 = init_params(pkey)

    # small MNIST-like batch: [2, 1, 28, 28] -> flattened to [2, 784] inside
    x = jax.random.normal(xkey, (2, 1, 28, 28), dtype=jnp.float32)

    out = mymodel_forward(x, w1, b1, w2, b2)
    jax.block_until_ready(out)

    # sanity check against plain-JAX f32 reference (bf16 matmul/store -> loose tol)
    x2d = x.reshape(-1, K_IN)
    ref = jnp.maximum(x2d @ w1 + b1, 0.0) @ w2 + b2
    assert out.shape == (2, N_OUT)
    assert jnp.allclose(out, ref, atol=2e-2, rtol=2e-2)

    print("KERNEL_OK")
</pallas_src>

<mosaic_0001>
module attributes {stable_mosaic.version = 11 : i64} {
  func.func @_mlp_kernel(%arg0: i32, %arg1: memref<8x784xf32, #tpu.memory_space<vmem>>, %arg2: memref<784x128xbf16, #tpu.memory_space<vmem>>, %arg3: memref<1x128xf32, #tpu.memory_space<vmem>>, %arg4: memref<128x128xbf16, #tpu.memory_space<vmem>>, %arg5: memref<1x128xf32, #tpu.memory_space<vmem>>, %arg6: memref<8x128xbf16, #tpu.memory_space<vmem>>) attributes {dimension_semantics = [#tpu.dimension_semantics<parallel>], iteration_bounds = array<i64: 1>, scalar_prefetch = 0 : i64, scratch_operands = 0 : i64, tpu.core_type = #tpu.core_type<tc>, window_params = [{transform_indices = @transform_0, window_bounds = array<i64: 8, 784>}, {pipeline_mode = #tpu.pipeline_mode<synchronous>, transform_indices = @transform_1, window_bounds = array<i64: 784, 128>}, {pipeline_mode = #tpu.pipeline_mode<synchronous>, transform_indices = @transform_2, window_bounds = array<i64: 1, 128>}, {pipeline_mode = #tpu.pipeline_mode<synchronous>, transform_indices = @transform_3, window_bounds = array<i64: 128, 128>}, {pipeline_mode = #tpu.pipeline_mode<synchronous>, transform_indices = @transform_4, window_bounds = array<i64: 1, 128>}, {transform_indices = @transform_5, window_bounds = array<i64: 8, 128>}]} {
    %c0 = arith.constant 0 : index
    %c0_0 = arith.constant 0 : index
    %0 = vector.load %arg1[%c0, %c0_0] : memref<8x784xf32, #tpu.memory_space<vmem>>, vector<8x784xf32>
    %1 = arith.truncf %0 : vector<8x784xf32> to vector<8x784xbf16>
    %c0_1 = arith.constant 0 : index
    %c0_2 = arith.constant 0 : index
    %2 = vector.load %arg2[%c0_1, %c0_2] : memref<784x128xbf16, #tpu.memory_space<vmem>>, vector<784x128xbf16>
    %cst = arith.constant dense<0.000000e+00> : vector<8x128xf32>
    %3 = tpu.matmul %1, %2, %cst {dimension_numbers = #tpu.dot_dimension_numbers<[1], [0], [0], [1], [0, 0, 1, 1], [], []>} : vector<8x784xbf16>, vector<784x128xbf16>, vector<8x128xf32> -> vector<8x128xf32>
    %c0_3 = arith.constant 0 : index
    %c0_4 = arith.constant 0 : index
    %4 = vector.load %arg3[%c0_3, %c0_4] : memref<1x128xf32, #tpu.memory_space<vmem>>, vector<1x128xf32>
    %5 = vector.broadcast %4 : vector<1x128xf32> to vector<8x128xf32>
    %6 = arith.addf %3, %5 : vector<8x128xf32>
    %cst_5 = arith.constant 0.000000e+00 : f32
    %7 = vector.broadcast %cst_5 : f32 to vector<8x128xf32>
    %8 = arith.maximumf %6, %7 : vector<8x128xf32>
    %9 = arith.truncf %8 : vector<8x128xf32> to vector<8x128xbf16>
    %c0_6 = arith.constant 0 : index
    %c0_7 = arith.constant 0 : index
    %10 = vector.load %arg4[%c0_6, %c0_7] : memref<128x128xbf16, #tpu.memory_space<vmem>>, vector<128x128xbf16>
    %cst_8 = arith.constant dense<0.000000e+00> : vector<8x128xf32>
    %11 = tpu.matmul %9, %10, %cst_8 {dimension_numbers = #tpu.dot_dimension_numbers<[1], [0], [0], [1], [0, 0, 1, 1], [], []>} : vector<8x128xbf16>, vector<128x128xbf16>, vector<8x128xf32> -> vector<8x128xf32>
    %c0_9 = arith.constant 0 : index
    %c0_10 = arith.constant 0 : index
    %12 = vector.load %arg5[%c0_9, %c0_10] : memref<1x128xf32, #tpu.memory_space<vmem>>, vector<1x128xf32>
    %13 = vector.broadcast %12 : vector<1x128xf32> to vector<8x128xf32>
    %14 = arith.addf %11, %13 : vector<8x128xf32>
    %15 = arith.truncf %14 : vector<8x128xf32> to vector<8x128xbf16>
    %c0_11 = arith.constant 0 : index
    %c0_12 = arith.constant 0 : index
    %16 = vector.load %arg6[%c0_11, %c0_12] : memref<8x128xbf16, #tpu.memory_space<vmem>>, vector<8x128xbf16>
    tpu.vector_store %arg6[%c0_11, %c0_12], %15 {strides = array<i32>} : memref<8x128xbf16, #tpu.memory_space<vmem>>, vector<8x128xbf16>,
    return
  }
  func.func @transform_0(%arg0: i32) -> (i32, i32) {
    %c0_i32 = arith.constant 0 : i32
    %c0_i32_0 = arith.constant 0 : i32
    return %arg0, %c0_i32 : i32, i32
  }
  func.func @transform_1(%arg0: i32) -> (i32, i32) {
    %c0_i32 = arith.constant 0 : i32
    %c0_i32_0 = arith.constant 0 : i32
    %c0_i32_1 = arith.constant 0 : i32
    return %c0_i32, %c0_i32_0 : i32, i32
  }
  func.func @transform_2(%arg0: i32) -> (i32, i32) {
    %c0_i32 = arith.constant 0 : i32
    %c0_i32_0 = arith.constant 0 : i32
    %c0_i32_1 = arith.constant 0 : i32
    return %c0_i32, %c0_i32_0 : i32, i32
  }
  func.func @transform_3(%arg0: i32) -> (i32, i32) {
    %c0_i32 = arith.constant 0 : i32
    %c0_i32_0 = arith.constant 0 : i32
    %c0_i32_1 = arith.constant 0 : i32
    return %c0_i32, %c0_i32_0 : i32, i32
  }
  func.func @transform_4(%arg0: i32) -> (i32, i32) {
    %c0_i32 = arith.constant 0 : i32
    %c0_i32_0 = arith.constant 0 : i32
    %c0_i32_1 = arith.constant 0 : i32
    return %c0_i32, %c0_i32_0 : i32, i32
  }
  func.func @transform_5(%arg0: i32) -> (i32, i32) {
    %c0_i32 = arith.constant 0 : i32
    %c0_i32_0 = arith.constant 0 : i32
    return %arg0, %c0_i32 : i32, i32
  }
}

</mosaic_0001>

<llo_original>
// kernel: mymodel_forward.1
$region0: #{mymodel_forward.1}
  #allocation0 [shape = 'u32[]', space=smem, size = 0x4, offset = 0x4, fixed_abs, tag = 'smem constant byte address 0x4 - core index']
  #allocation1 [shape = 'u32[144,128]{1,0:T(1,128)}', space=vmem, size = 0x12000, scoped, tag = 'internal scratch']
  %s0 = inlined_call_operand.vmem [shape: f32[2,784], index: 0, kind: input, shape index: {}]
  %s1 = inlined_call_operand.vmem [shape: bf16[784,128], index: 1, kind: input, shape index: {}]
  %s2 = inlined_call_operand.vmem [shape: f32[1,128], index: 2, kind: input, shape index: {}]
  %s3 = inlined_call_operand.vmem [shape: bf16[128,128], index: 3, kind: input, shape index: {}]
  %s4 = inlined_call_operand.vmem [shape: f32[1,128], index: 4, kind: input, shape index: {}]
  %s5 = inlined_call_operand.vmem [shape: bf16[2,128], index: 5, kind: output, shape index: {}]
  %s6 = sld [smem:[#allocation0]]
  $region60: #{mymodel_forward.1} parent=0
    _
  %s8 = ssub.s32 1, %s6
  %s9 = scalar_select 0, %s8, %s6
  $region1: #{mymodel_forward.1} parent=0
    #allocation2 [shape = 'u8[2048]{0}', space=vmem, size = 0x800, scoped, tag = 'output window, operand 0, single buffered']
    // Predicated region
    $region2: #{mymodel_forward.1} parent=1 // pred_check
      _
    $region3: #{mymodel_forward.1} parent=1 // pred_check_branch
      %11 = sbr.rel (0) target = $region5
    $region4: #{mymodel_forward.1} parent=1 // pred_region
      _
    $region5: #{mymodel_forward.1} parent=1 // pred_fallthru
      _
    // Predicated region
    $region6: #{mymodel_forward.1} parent=1 // pred_check
      _
    $region7: #{mymodel_forward.1} parent=1 // pred_check_branch
      %13 = sbr.rel (0) target = $region9
    $region8: #{mymodel_forward.1} parent=1 // pred_region
      _
    $region9: #{mymodel_forward.1} parent=1 // pred_fallthru
      _
    // Predicated region
    $region10: #{mymodel_forward.1} parent=1 // pred_check
      _
    $region11: #{mymodel_forward.1} parent=1 // pred_check_branch
      %15 = sbr.rel (0) target = $region13
    $region12: #{mymodel_forward.1} parent=1 // pred_region
      _
    $region13: #{mymodel_forward.1} parent=1 // pred_fallthru
      _
    // Predicated region
    $region14: #{mymodel_forward.1} parent=1 // pred_check
      _
    $region15: #{mymodel_forward.1} parent=1 // pred_check_branch
      %17 = sbr.rel (0) target = $region17
    $region16: #{mymodel_forward.1} parent=1 // pred_region
      _
    $region17: #{mymodel_forward.1} parent=1 // pred_fallthru
      _
    // Predicated region
    $region18: #{mymodel_forward.1} parent=1 // pred_check
      _
    $region19: #{mymodel_forward.1} parent=1 // pred_check_branch
      %19 = sbr.rel (0) target = $region21
    $region20: #{mymodel_forward.1} parent=1 // pred_region
      _
    $region21: #{mymodel_forward.1} parent=1 // pred_fallthru
      _
    %v21 = vld [vmem:[%s0] sm:$0xff]
    %v22 = vld [vmem:[%s0 + $0x8] sm:$0x3f]
    %v23 = vld [vmem:[%s0 + $0xe] sm:$0xff]
    %v24 = vld [vmem:[%s0 + $0x16] sm:$0x3f]
    %v25 = vld [vmem:[%s0 + $0x1c] sm:$0xff]
    %v26 = vld [vmem:[%s0 + $0x24] sm:$0x3f]
    %v27 = vld [vmem:[%s0 + $0x2a] sm:$0xff]
    %v28 = vld [vmem:[%s0 + $0x32] sm:$0x3f]
    %v37 = vcombine.low %v21, %v23
    %v38 = vcombine.high %v21, %v23
    %v39 = vcombine.low %v25, %v27
    %v40 = vcombine.high %v25, %v27
    %v42 = vunpack.c.l.s4 1983009808
    %v43 = vunpack.c.0.s8 %v42
    %v44 = vlaneseq
    %v45 = vshrl.u32 %v44, 7
    %v46 = vsub.s32 %v43, %v45
    %v47 = vrot.slane %v37, %v46
    %v49 = vunpack.c.l.s4 1983009808
    %v50 = vunpack.c.0.s8 %v49
    %v51 = vlaneseq
    %v52 = vshrl.u32 %v51, 7
    %v53 = vsub.s32 %v50, %v52
    %v54 = vrot.slane %v38, %v53
    %v56 = vunpack.c.l.s4 1983009808
    %v57 = vunpack.c.0.s8 %v56
    %v58 = vlaneseq
    %v59 = vshrl.u32 %v58, 7
    %v60 = vsub.s32 %v57, %v59
    %v61 = vrot.slane %v39, %v60
    %v63 = vunpack.c.l.s4 1983009808
    %v64 = vunpack.c.0.s8 %v63
    %v65 = vlaneseq
    %v66 = vshrl.u32 %v65, 7
    %v67 = vsub.s32 %v64, %v66
    %v68 = vrot.slane %v40, %v67
    %v69 = vcombine.low %v47, %v61
    %v70 = vcombine.high %v47, %v61
    %v71 = vcombine.low %v54, %v68
    %v72 = vcombine.high %v54, %v68
    %v73 = vcombine.low %v22, %v24
    %v74 = vcombine.high %v22, %v24
    %v75 = vcombine.low %v26, %v28
    %v76 = vcombine.high %v26, %v28
    %v78 = vunpack.c.l.s4 1983009808
    %v79 = vunpack.c.0.s8 %v78
    %v80 = vlaneseq
    %v81 = vshrl.u32 %v80, 7
    %v82 = vsub.s32 %v79, %v81
    %v83 = vrot.slane %v73, %v82
    %v85 = vunpack.c.l.s4 1983009808
    %v86 = vunpack.c.0.s8 %v85
    %v87 = vlaneseq
    %v88 = vshrl.u32 %v87, 7
    %v89 = vsub.s32 %v86, %v88
    %v90 = vrot.slane %v74, %v89
    %v92 = vunpack.c.l.s4 1983009808
    %v93 = vunpack.c.0.s8 %v92
    %v94 = vlaneseq
    %v95 = vshrl.u32 %v94, 7
    %v96 = vsub.s32 %v93, %v95
    %v97 = vrot.slane %v75, %v96
    %v99 = vunpack.c.l.s4 1983009808
    %v100 = vunpack.c.0.s8 %v99
    %v101 = vlaneseq
    %v102 = vshrl.u32 %v101, 7
    %v103 = vsub.s32 %v100, %v102
    %v104 = vrot.slane %v76, %v103
    %v105 = vcombine.low %v83, %v97
    %v106 = vcombine.high %v83, %v97
    %v107 = vcombine.low %v90, %v104
    %v115 = vpack.c.bf16 %v69, %v69
    %v116 = vpack.c.bf16 %v70, %v70
    %v117 = vpack.c.bf16 %v71, %v71
    %v118 = vpack.c.bf16 %v72, %v72
    %v119 = vpack.c.bf16 %v105, %v105
    %v120 = vpack.c.bf16 %v106, %v106
    %v121 = vpack.c.bf16 %v107, %v107
    %v122 = vld [vmem:[%s1] sm:$0xf]
    %v123 = vld [vmem:[%s1 + $0x4] sm:$0xf]
    %v124 = vld [vmem:[%s1 + $0x8] sm:$0xf]
    %v125 = vld [vmem:[%s1 + $0xc] sm:$0xf]
    %v126 = vld [vmem:[%s1 + $0x10] sm:$0xf]
    %v127 = vld [vmem:[%s1 + $0x14] sm:$0xf]
    %v128 = vld [vmem:[%s1 + $0x18] sm:$0xf]
    %v129 = vld [vmem:[%s1 + $0x1c] sm:$0xf]
    %v130 = vld [vmem:[%s1 + $0x20] sm:$0xf]
    %v131 = vld [vmem:[%s1 + $0x24] sm:$0xf]
    %v132 = vld [vmem:[%s1 + $0x28] sm:$0xf]
    %v133 = vld [vmem:[%s1 + $0x2c] sm:$0xf]
    %v134 = vld [vmem:[%s1 + $0x30] sm:$0xf]
    %v135 = vld [vmem:[%s1 + $0x34] sm:$0xf]
    %v136 = vld [vmem:[%s1 + $0x38] sm:$0xf]
    %v137 = vld [vmem:[%s1 + $0x3c] sm:$0xf]
    %v138 = vld [vmem:[%s1 + $0x40] sm:$0xf]
    %v139 = vld [vmem:[%s1 + $0x44] sm:$0xf]
    %v140 = vld [vmem:[%s1 + $0x48] sm:$0xf]
    %v141 = vld [vmem:[%s1 + $0x4c] sm:$0xf]
    %v142 = vld [vmem:[%s1 + $0x50] sm:$0xf]
    %v143 = vld [vmem:[%s1 + $0x54] sm:$0xf]
    %v144 = vld [vmem:[%s1 + $0x58] sm:$0xf]
    %v145 = vld [vmem:[%s1 + $0x5c] sm:$0xf]
    %v146 = vld [vmem:[%s1 + $0x60] sm:$0xf]
    %v147 = vld [vmem:[%s1 + $0x64] sm:$0xf]
    %v148 = vld [vmem:[%s1 + $0x68] sm:$0xf]
    %v149 = vld [vmem:[%s1 + $0x6c] sm:$0xf]
    %v150 = vld [vmem:[%s1 + $0x70] sm:$0xf]
    %v151 = vld [vmem:[%s1 + $0x74] sm:$0xf]
    %v152 = vld [vmem:[%s1 + $0x78] sm:$0xf]
    %v153 = vld [vmem:[%s1 + $0x7c] sm:$0xf]
    %v154 = vld [vmem:[%s1 + $0x80] sm:$0xf]
    %v155 = vld [vmem:[%s1 + $0x84] sm:$0xf]
    %v156 = vld [vmem:[%s1 + $0x88] sm:$0xf]
    %v157 = vld [vmem:[%s1 + $0x8c] sm:$0xf]
    %v158 = vld [vmem:[%s1 + $0x90] sm:$0xf]
    %v159 = vld [vmem:[%s1 + $0x94] sm:$0xf]
    %v160 = vld [vmem:[%s1 + $0x98] sm:$0xf]
    %v161 = vld [vmem:[%s1 + $0x9c] sm:$0xf]
    %v162 = vld [vmem:[%s1 + $0xa0] sm:$0xf]
    %v163 = vld [vmem:[%s1 + $0xa4] sm:$0xf]
    %v164 = vld [vmem:[%s1 + $0xa8] sm:$0xf]
    %v165 = vld [vmem:[%s1 + $0xac] sm:$0xf]
    %v166 = vld [vmem:[%s1 + $0xb0] sm:$0xf]
    %v167 = vld [vmem:[%s1 + $0xb4] sm:$0xf]
    %v168 = vld [vmem:[%s1 + $0xb8] sm:$0xf]
    %v169 = vld [vmem:[%s1 + $0xbc] sm:$0xf]
    %v170 = vld [vmem:[%s1 + $0xc0] sm:$0xf]
    %v171 = vld [vmem:[%s1 + $0xc4] sm:$0xf]
    %v172 = vld [vmem:[%s1 + $0xc8] sm:$0xf]
    %v173 = vld [vmem:[%s1 + $0xcc] sm:$0xf]
    %v174 = vld [vmem:[%s1 + $0xd0] sm:$0xf]
    %v175 = vld [vmem:[%s1 + $0xd4] sm:$0xf]
    %v176 = vld [vmem:[%s1 + $0xd8] sm:$0xf]
    %v177 = vld [vmem:[%s1 + $0xdc] sm:$0xf]
    %v178 = vld [vmem:[%s1 + $0xe0] sm:$0xf]
    %v179 = vld [vmem:[%s1 + $0xe4] sm:$0xf]
    %v180 = vld [vmem:[%s1 + $0xe8] sm:$0xf]
    %v181 = vld [vmem:[%s1 + $0xec] sm:$0xf]
    %v182 = vld [vmem:[%s1 + $0xf0] sm:$0xf]
    %v183 = vld [vmem:[%s1 + $0xf4] sm:$0xf]
    %v184 = vld [vmem:[%s1 + $0xf8] sm:$0xf]
    %v185 = vld [vmem:[%s1 + $0xfc] sm:$0xf]
    %v186 = vld [vmem:[%s1 + $0x100] sm:$0xf]
    %v187 = vld [vmem:[%s1 + $0x104] sm:$0xf]
    %v188 = vld [vmem:[%s1 + $0x108] sm:$0xf]
    %v189 = vld [vmem:[%s1 + $0x10c] sm:$0xf]
    %v190 = vld [vmem:[%s1 + $0x110] sm:$0xf]
    %v191 = vld [vmem:[%s1 + $0x114] sm:$0xf]
    %v192 = vld [vmem:[%s1 + $0x118] sm:$0xf]
    %v193 = vld [vmem:[%s1 + $0x11c] sm:$0xf]
    %v194 = vld [vmem:[%s1 + $0x120] sm:$0xf]
    %v195 = vld [vmem:[%s1 + $0x124] sm:$0xf]
    %v196 = vld [vmem:[%s1 + $0x128] sm:$0xf]
    %v197 = vld [vmem:[%s1 + $0x12c] sm:$0xf]
    %v198 = vld [vmem:[%s1 + $0x130] sm:$0xf]
    %v199 = vld [vmem:[%s1 + $0x134] sm:$0xf]
    %v200 = vld [vmem:[%s1 + $0x138] sm:$0xf]
    %v201 = vld [vmem:[%s1 + $0x13c] sm:$0xf]
    %v202 = vld [vmem:[%s1 + $0x140] sm:$0xf]
    %v203 = vld [vmem:[%s1 + $0x144] sm:$0xf]
    %v204 = vld [vmem:[%s1 + $0x148] sm:$0xf]
    %v205 = vld [vmem:[%s1 + $0x14c] sm:$0xf]
    %v206 = vld [vmem:[%s1 + $0x150] sm:$0xf]
    %v207 = vld [vmem:[%s1 + $0x154] sm:$0xf]
    %v208 = vld [vmem:[%s1 + $0x158] sm:$0xf]
    %v209 = vld [vmem:[%s1 + $0x15c] sm:$0xf]
    %v210 = vld [vmem:[%s1 + $0x160] sm:$0xf]
    %v211 = vld [vmem:[%s1 + $0x164] sm:$0xf]
    %v212 = vld [vmem:[%s1 + $0x168] sm:$0xf]
    %v213 = vld [vmem:[%s1 + $0x16c] sm:$0xf]
    %v214 = vld [vmem:[%s1 + $0x170] sm:$0xf]
    %v215 = vld [vmem:[%s1 + $0x174] sm:$0xf]
    %v216 = vld [vmem:[%s1 + $0x178] sm:$0xf]
    %v217 = vld [vmem:[%s1 + $0x17c] sm:$0xf]
    %v218 = vld [vmem:[%s1 + $0x180] sm:$0xf]
    %v219 = vld [vmem:[%s1 + $0x184] sm:$0xf]
    %v220 = vld [vmem:[%s2] sm:$0x1]
    %v222 = vlaneseq
    %v223 = vshrl.u32 %v222, 7
    %v224 = vsub.s32 0, %v223
    %v225 = vrot.slane %v220, %v224
    %v325 = vunpack.c.l.b16 %v122
    %v326 = vunpack.c.l.b16 %v123
    %v327 = vunpack.c.l.b16 %v124
    %v328 = vunpack.c.l.b16 %v125
    %v329 = vunpack.c.l.b16 %v126
    %v330 = vunpack.c.l.b16 %v127
    %v331 = vunpack.c.l.b16 %v128
    %v332 = vunpack.c.l.b16 %v129
    %v333 = vunpack.c.l.b16 %v130
    %v334 = vunpack.c.l.b16 %v131
    %v335 = vunpack.c.l.b16 %v132
    %v336 = vunpack.c.l.b16 %v133
    %v337 = vunpack.c.l.b16 %v134
    %v338 = vunpack.c.l.b16 %v135
    %v339 = vunpack.c.l.b16 %v136
    %v340 = vunpack.c.l.b16 %v137
    %v341 = vunpack.c.l.b16 %v138
    %v342 = vunpack.c.l.b16 %v139
    %v343 = vunpack.c.l.b16 %v140
    %v344 = vunpack.c.l.b16 %v141
    %v345 = vunpack.c.l.b16 %v142
    %v346 = vunpack.c.l.b16 %v143
    %v347 = vunpack.c.l.b16 %v144
    %v348 = vunpack.c.l.b16 %v145
    %v349 = vunpack.c.l.b16 %v146
    %v350 = vunpack.c.l.b16 %v147
    %v351 = vunpack.c.l.b16 %v148
    %v352 = vunpack.c.l.b16 %v149
    %v353 = vunpack.c.l.b16 %v150
    %v354 = vunpack.c.l.b16 %v151
    %v355 = vunpack.c.l.b16 %v152
    %v356 = vunpack.c.l.b16 %v153
    %v357 = vunpack.c.l.b16 %v154
    %v358 = vunpack.c.l.b16 %v155
    %v359 = vunpack.c.l.b16 %v156
    %v360 = vunpack.c.l.b16 %v157
    %v361 = vunpack.c.l.b16 %v158
    %v362 = vunpack.c.l.b16 %v159
    %v363 = vunpack.c.l.b16 %v160
    %v364 = vunpack.c.l.b16 %v161
    %v365 = vunpack.c.l.b16 %v162
    %v366 = vunpack.c.l.b16 %v163
    %v367 = vunpack.c.l.b16 %v164
    %v368 = vunpack.c.l.b16 %v165
    %v369 = vunpack.c.l.b16 %v166
    %v370 = vunpack.c.l.b16 %v167
    %v371 = vunpack.c.l.b16 %v168
    %v372 = vunpack.c.l.b16 %v169
    %v373 = vunpack.c.l.b16 %v170
    %v374 = vunpack.c.l.b16 %v171
    %v375 = vunpack.c.l.b16 %v172
    %v376 = vunpack.c.l.b16 %v173
    %v377 = vunpack.c.l.b16 %v174
    %v378 = vunpack.c.l.b16 %v175
    %v379 = vunpack.c.l.b16 %v176
    %v380 = vunpack.c.l.b16 %v177
    %v381 = vunpack.c.l.b16 %v178
    %v382 = vunpack.c.l.b16 %v179
    %v383 = vunpack.c.l.b16 %v180
    %v384 = vunpack.c.l.b16 %v181
    %v385 = vunpack.c.l.b16 %v182
    %v386 = vunpack.c.l.b16 %v183
    %v387 = vunpack.c.l.b16 %v184
    %v388 = vunpack.c.l.b16 %v185
    %v389 = vunpack.c.l.b16 %v186
    %v390 = vunpack.c.l.b16 %v187
    %v391 = vunpack.c.l.b16 %v188
    %v392 = vunpack.c.l.b16 %v189
    %v393 = vunpack.c.l.b16 %v190
    %v394 = vunpack.c.l.b16 %v191
    %v395 = vunpack.c.l.b16 %v192
    %v396 = vunpack.c.l.b16 %v193
    %v397 = vunpack.c.l.b16 %v194
    %v398 = vunpack.c.l.b16 %v195
    %v399 = vunpack.c.l.b16 %v196
    %v400 = vunpack.c.l.b16 %v197
    %v401 = vunpack.c.l.b16 %v198
    %v402 = vunpack.c.l.b16 %v199
    %v403 = vunpack.c.l.b16 %v200
    %v404 = vunpack.c.l.b16 %v201
    %v405 = vunpack.c.l.b16 %v202
    %v406 = vunpack.c.l.b16 %v203
    %v407 = vunpack.c.l.b16 %v204
    %v408 = vunpack.c.l.b16 %v205
    %v409 = vunpack.c.l.b16 %v206
    %v410 = vunpack.c.l.b16 %v207
    %v411 = vunpack.c.l.b16 %v208
    %v412 = vunpack.c.l.b16 %v209
    %v413 = vunpack.c.l.b16 %v210
    %v414 = vunpack.c.l.b16 %v211
    %v415 = vunpack.c.l.b16 %v212
    %v416 = vunpack.c.l.b16 %v213
    %v417 = vunpack.c.l.b16 %v214
    %v418 = vunpack.c.l.b16 %v215
    %v419 = vunpack.c.l.b16 %v216
    %v420 = vunpack.c.l.b16 %v217
    %v421 = vunpack.c.l.b16 %v218
    %v422 = vunpack.c.l.b16 %v219
    %v423 = vpack.c.b16 %v326, %v325
    %v424 = vpack.c.b16 %v328, %v327
    %v425 = vpack.c.b16 %v330, %v329
    %v426 = vpack.c.b16 %v332, %v331
    %v427 = vpack.c.b16 %v334, %v333
    %v428 = vpack.c.b16 %v336, %v335
    %v429 = vpack.c.b16 %v338, %v337
    %v430 = vpack.c.b16 %v340, %v339
    %v431 = vpack.c.b16 %v342, %v341
    %v432 = vpack.c.b16 %v344, %v343
    %v433 = vpack.c.b16 %v346, %v345
    %v434 = vpack.c.b16 %v348, %v347
    %v435 = vpack.c.b16 %v350, %v349
    %v436 = vpack.c.b16 %v352, %v351
    %v437 = vpack.c.b16 %v354, %v353
    %v438 = vpack.c.b16 %v356, %v355
    %v439 = vpack.c.b16 %v358, %v357
    %v440 = vpack.c.b16 %v360, %v359
    %v441 = vpack.c.b16 %v362, %v361
    %v442 = vpack.c.b16 %v364, %v363
    %v443 = vpack.c.b16 %v366, %v365
    %v444 = vpack.c.b16 %v368, %v367
    %v445 = vpack.c.b16 %v370, %v369
    %v446 = vpack.c.b16 %v372, %v371
    %v447 = vpack.c.b16 %v374, %v373
    %v448 = vpack.c.b16 %v376, %v375
    %v449 = vpack.c.b16 %v378, %v377
    %v450 = vpack.c.b16 %v380, %v379
    %v451 = vpack.c.b16 %v382, %v381
    %v452 = vpack.c.b16 %v384, %v383
    %v453 = vpack.c.b16 %v386, %v385
    %v454 = vpack.c.b16 %v388, %v387
    %v455 = vpack.c.b16 %v390, %v389
    %v456 = vpack.c.b16 %v392, %v391
    %v457 = vpack.c.b16 %v394, %v393
    %v458 = vpack.c.b16 %v396, %v395
    %v459 = vpack.c.b16 %v398, %v397
    %v460 = vpack.c.b16 %v400, %v399
    %v461 = vpack.c.b16 %v402, %v401
    %v462 = vpack.c.b16 %v404, %v403
    %v463 = vpack.c.b16 %v406, %v405
    %v464 = vpack.c.b16 %v408, %v407
    %v465 = vpack.c.b16 %v410, %v409
    %v466 = vpack.c.b16 %v412, %v411
    %v467 = vpack.c.b16 %v414, %v413
    %v468 = vpack.c.b16 %v416, %v415
    %v469 = vpack.c.b16 %v418, %v417
    %v470 = vpack.c.b16 %v420, %v419
    %v471 = vpack.c.b16 %v422, %v421
    %vm521 = vcmask 130048
    %v523 = vsel %vm521, %v121, 0
    %525 = vmatprep.subr.bf16.mxu0 0
    %526 = vmatpush1.bf16.msra.mxu0 %v423
    %527 = vmatprep.subr.bf16.mxu0 0
    %528 = vmatpush1.bf16.msra.mxu0 %v424
    %529 = vmatprep.subr.bf16.mxu0 0
    %530 = vmatpush1.bf16.msra.mxu0 %v425
    %531 = vmatprep.subr.bf16.mxu0 0
    %532 = vmatpush1.bf16.msra.mxu0 %v426
    %533 = vmatprep.subr.bf16.mxu0 0
    %534 = vmatpush1.bf16.msra.mxu0 %v427
    %535 = vmatprep.subr.bf16.mxu0 0
    %536 = vmatpush1.bf16.msra.mxu0 %v428
    %537 = vmatprep.subr.bf16.mxu0 0
    %538 = vmatpush1.bf16.msra.mxu0 %v429
    %539 = vmatprep.subr.bf16.mxu0 0
    %540 = vmatpush1.bf16.msra.mxu0 %v430
    %541 = vmatprep.subr.bf16.mxu0 0
    %542 = vmatpush1.bf16.msra.mxu0 %v431
    %543 = vmatprep.subr.bf16.mxu0 0
    %544 = vmatpush1.bf16.msra.mxu0 %v432
    %545 = vmatprep.subr.bf16.mxu0 0
    %546 = vmatpush1.bf16.msra.mxu0 %v433
    %547 = vmatprep.subr.bf16.mxu0 0
    %548 = vmatpush1.bf16.msra.mxu0 %v434
    %549 = vmatprep.subr.bf16.mxu0 0
    %550 = vmatpush1.bf16.msra.mxu0 %v435
    %551 = vmatprep.subr.bf16.mxu0 0
    %552 = vmatpush1.bf16.msra.mxu0 %v436
    %553 = vmatprep.subr.bf16.mxu0 0
    %554 = vmatpush1.bf16.msra.mxu0 %v437
    %555 = vmatprep.subr.bf16.mxu0 0
    %556 = vmatpush1.bf16.msra.mxu0 %v438
    %557 = vmatprep.mubr.bf16.mxu0 %v116
    %558 = vmatmul.mubr.bf16.gmra.mrb[0].mxu0 %v115
    %v559 = vpop.f32.mrb[0].mxu0
    %v560 = vadd.f32 %v225, %v559
    %v561 = vpop.f32.mrb[0].mxu0
    %v562 = vpop.f32.mrb[0].mxu0
    %v563 = vpop.f32.mrb[0].mxu0
    %564 = vdwg.mxu0
    %565 = vmatprep.subr.bf16.mxu0 0
    %566 = vmatpush1.bf16.msra.mxu0 %v439
    %567 = vmatprep.subr.bf16.mxu0 0
    %568 = vmatpush1.bf16.msra.mxu0 %v440
    %569 = vmatprep.subr.bf16.mxu0 0
    %570 = vmatpush1.bf16.msra.mxu0 %v441
    %571 = vmatprep.subr.bf16.mxu0 0
    %572 = vmatpush1.bf16.msra.mxu0 %v442
    %573 = vmatprep.subr.bf16.mxu0 0
    %574 = vmatpush1.bf16.msra.mxu0 %v443
    %575 = vmatprep.subr.bf16.mxu0 0
    %576 = vmatpush1.bf16.msra.mxu0 %v444
    %577 = vmatprep.subr.bf16.mxu0 0
    %578 = vmatpush1.bf16.msra.mxu0 %v445
    %579 = vmatprep.subr.bf16.mxu0 0
    %580 = vmatpush1.bf16.msra.mxu0 %v446
    %581 = vmatprep.subr.bf16.mxu0 0
    %582 = vmatpush1.bf16.msra.mxu0 %v447
    %583 = vmatprep.subr.bf16.mxu0 0
    %584 = vmatpush1.bf16.msra.mxu0 %v448
    %585 = vmatprep.subr.bf16.mxu0 0
    %586 = vmatpush1.bf16.msra.mxu0 %v449
    %587 = vmatprep.subr.bf16.mxu0 0
    %588 = vmatpush1.bf16.msra.mxu0 %v450
    %589 = vmatprep.subr.bf16.mxu0 0
    %590 = vmatpush1.bf16.msra.mxu0 %v451
    %591 = vmatprep.subr.bf16.mxu0 0
    %592 = vmatpush1.bf16.msra.mxu0 %v452
    %593 = vmatprep.subr.bf16.mxu0 0
    %594 = vmatpush1.bf16.msra.mxu0 %v453
    %595 = vmatprep.subr.bf16.mxu0 0
    %596 = vmatpush1.bf16.msra.mxu0 %v454
    %597 = vmatprep.mubr.bf16.mxu0 %v118
    %598 = vmatmul.mubr.bf16.gmra.mrb[0].mxu0 %v117
    %v599 = vpop.f32.mrb[0].mxu0
    %v600 = vadd.f32 %v560, %v599
    %v601 = vpop.f32.mrb[0].mxu0
    %v602 = vpop.f32.mrb[0].mxu0
    %v603 = vpop.f32.mrb[0].mxu0
    %604 = vdwg.mxu0
    %605 = vmatprep.subr.bf16.mxu0 0
    %606 = vmatpush1.bf16.msra.mxu0 %v455
    %607 = vmatprep.subr.bf16.mxu0 0
    %608 = vmatpush1.bf16.msra.mxu0 %v456
    %609 = vmatprep.subr.bf16.mxu0 0
    %610 = vmatpush1.bf16.msra.mxu0 %v457
    %611 = vmatprep.subr.bf16.mxu0 0
    %612 = vmatpush1.bf16.msra.mxu0 %v458
    %613 = vmatprep.subr.bf16.mxu0 0
    %614 = vmatpush1.bf16.msra.mxu0 %v459
    %615 = vmatprep.subr.bf16.mxu0 0
    %616 = vmatpush1.bf16.msra.mxu0 %v460
    %617 = vmatprep.subr.bf16.mxu0 0
    %618 = vmatpush1.bf16.msra.mxu0 %v461
    %619 = vmatprep.subr.bf16.mxu0 0
    %620 = vmatpush1.bf16.msra.mxu0 %v462
    %621 = vmatprep.subr.bf16.mxu0 0
    %622 = vmatpush1.bf16.msra.mxu0 %v463
    %623 = vmatprep.subr.bf16.mxu0 0
    %624 = vmatpush1.bf16.msra.mxu0 %v464
    %625 = vmatprep.subr.bf16.mxu0 0
    %626 = vmatpush1.bf16.msra.mxu0 %v465
    %627 = vmatprep.subr.bf16.mxu0 0
    %628 = vmatpush1.bf16.msra.mxu0 %v466
    %629 = vmatprep.subr.bf16.mxu0 0
    %630 = vmatpush1.bf16.msra.mxu0 %v467
    %631 = vmatprep.subr.bf16.mxu0 0
    %632 = vmatpush1.bf16.msra.mxu0 %v468
    %633 = vmatprep.subr.bf16.mxu0 0
    %634 = vmatpush1.bf16.msra.mxu0 %v469
    %635 = vmatprep.subr.bf16.mxu0 0
    %636 = vmatpush1.bf16.msra.mxu0 %v470
    %637 = vmatprep.mubr.bf16.mxu0 %v120
    %638 = vmatmul.mubr.bf16.gmra.mrb[0].mxu0 %v119
    %v639 = vpop.f32.mrb[0].mxu0
    %v640 = vadd.f32 %v600, %v639
    %v641 = vpop.f32.mrb[0].mxu0
    %v642 = vpop.f32.mrb[0].mxu0
    %v643 = vpop.f32.mrb[0].mxu0
    %644 = vdwg.mxu0
    %645 = vmatprep.subr.bf16.mxu0 0
    %646 = vmatpush1.bf16.msra.mxu0 %v471
    %647 = vmatprep.subr.bf16.mxu0 0
    %648 = vmatpush1.bf16.msra.mxu0 0
    %649 = vmatprep.subr.bf16.mxu0 0
    %650 = vmatpush1.bf16.msra.mxu0 0
    %651 = vmatprep.subr.bf16.mxu0 0
    %652 = vmatpush1.bf16.msra.mxu0 0
    %653 = vmatprep.subr.bf16.mxu0 0
    %654 = vmatpush1.bf16.msra.mxu0 0
    %655 = vmatprep.subr.bf16.mxu0 0
    %656 = vmatpush1.bf16.msra.mxu0 0
    %657 = vmatprep.subr.bf16.mxu0 0
    %658 = vmatpush1.bf16.msra.mxu0 0
    %659 = vmatprep.subr.bf16.mxu0 0
    %660 = vmatpush1.bf16.msra.mxu0 0
    %661 = vmatprep.subr.bf16.mxu0 0
    %662 = vmatpush1.bf16.msra.mxu0 0
    %663 = vmatprep.subr.bf16.mxu0 0
    %664 = vmatpush1.bf16.msra.mxu0 0
    %665 = vmatprep.subr.bf16.mxu0 0
    %666 = vmatpush1.bf16.msra.mxu0 0
    %667 = vmatprep.subr.bf16.mxu0 0
    %668 = vmatpush1.bf16.msra.mxu0 0
    %669 = vmatprep.subr.bf16.mxu0 0
    %670 = vmatpush1.bf16.msra.mxu0 0
    %671 = vmatprep.subr.bf16.mxu0 0
    %672 = vmatpush1.bf16.msra.mxu0 0
    %673 = vmatprep.subr.bf16.mxu0 0
    %674 = vmatpush1.bf16.msra.mxu0 0
    %675 = vmatprep.subr.bf16.mxu0 0
    %676 = vmatpush1.bf16.msra.mxu0 0
    %677 = vmatprep.mubr.bf16.mxu0 0
    %678 = vmatmul.mubr.bf16.gmra.mrb[0].mxu0 %v523
    %v679 = vpop.f32.mrb[0].mxu0
    %v680 = vadd.f32 %v640, %v679
    %v681 = vpop.f32.mrb[0].mxu0
    %v682 = vpop.f32.mrb[0].mxu0
    %v683 = vpop.f32.mrb[0].mxu0
    %684 = vdwg.mxu0
    %v685 = vmax.f32 %v680, 0.0
    %v686 = vpack.c.bf16 %v685, %v685
    %v687 = vld [vmem:[%s3] sm:$0xf]
    %v688 = vld [vmem:[%s3 + $0x4] sm:$0xf]
    %v689 = vld [vmem:[%s3 + $0x8] sm:$0xf]
    %v690 = vld [vmem:[%s3 + $0xc] sm:$0xf]
    %v691 = vld [vmem:[%s3 + $0x10] sm:$0xf]
    %v692 = vld [vmem:[%s3 + $0x14] sm:$0xf]
    %v693 = vld [vmem:[%s3 + $0x18] sm:$0xf]
    %v694 = vld [vmem:[%s3 + $0x1c] sm:$0xf]
    %v695 = vld [vmem:[%s3 + $0x20] sm:$0xf]
    %v696 = vld [vmem:[%s3 + $0x24] sm:$0xf]
    %v697 = vld [vmem:[%s3 + $0x28] sm:$0xf]
    %v698 = vld [vmem:[%s3 + $0x2c] sm:$0xf]
    %v699 = vld [vmem:[%s3 + $0x30] sm:$0xf]
    %v700 = vld [vmem:[%s3 + $0x34] sm:$0xf]
    %v701 = vld [vmem:[%s3 + $0x38] sm:$0xf]
    %v702 = vld [vmem:[%s3 + $0x3c] sm:$0xf]
    %v703 = vld [vmem:[%s4] sm:$0x1]
    %v705 = vlaneseq
    %v706 = vshrl.u32 %v705, 7
    %v707 = vsub.s32 0, %v706
    %v708 = vrot.slane %v703, %v707
    %v726 = vunpack.c.l.b16 %v687
    %v727 = vunpack.c.l.b16 %v688
    %v728 = vunpack.c.l.b16 %v689
    %v729 = vunpack.c.l.b16 %v690
    %v730 = vunpack.c.l.b16 %v691
    %v731 = vunpack.c.l.b16 %v692
    %v732 = vunpack.c.l.b16 %v693
    %v733 = vunpack.c.l.b16 %v694
    %v734 = vunpack.c.l.b16 %v695
    %v735 = vunpack.c.l.b16 %v696
    %v736 = vunpack.c.l.b16 %v697
    %v737 = vunpack.c.l.b16 %v698
    %v738 = vunpack.c.l.b16 %v699
    %v739 = vunpack.c.l.b16 %v700
    %v740 = vunpack.c.l.b16 %v701
    %v741 = vunpack.c.l.b16 %v702
    %v742 = vpack.c.b16 %v727, %v726
    %v743 = vpack.c.b16 %v729, %v728
    %v744 = vpack.c.b16 %v731, %v730
    %v745 = vpack.c.b16 %v733, %v732
    %v746 = vpack.c.b16 %v735, %v734
    %v747 = vpack.c.b16 %v737, %v736
    %v748 = vpack.c.b16 %v739, %v738
    %v749 = vpack.c.b16 %v741, %v740
    %758 = vmatprep.subr.bf16.mxu0 0
    %759 = vmatpush1.bf16.msra.mxu0 %v742
    %760 = vmatprep.subr.bf16.mxu0 0
    %761 = vmatpush1.bf16.msra.mxu0 %v743
    %762 = vmatprep.subr.bf16.mxu0 0
    %763 = vmatpush1.bf16.msra.mxu0 %v744
    %764 = vmatprep.subr.bf16.mxu0 0
    %765 = vmatpush1.bf16.msra.mxu0 %v745
    %766 = vmatprep.subr.bf16.mxu0 0
    %767 = vmatpush1.bf16.msra.mxu0 %v746
    %768 = vmatprep.subr.bf16.mxu0 0
    %769 = vmatpush1.bf16.msra.mxu0 %v747
    %770 = vmatprep.subr.bf16.mxu0 0
    %771 = vmatpush1.bf16.msra.mxu0 %v748
    %772 = vmatprep.subr.bf16.mxu0 0
    %773 = vmatpush1.bf16.msra.mxu0 %v749
    %774 = vmatprep.subr.bf16.mxu0 0
    %775 = vmatpush1.bf16.msra.mxu0 0
    %776 = vmatprep.subr.bf16.mxu0 0
    %777 = vmatpush1.bf16.msra.mxu0 0
    %778 = vmatprep.subr.bf16.mxu0 0
    %779 = vmatpush1.bf16.msra.mxu0 0
    %780 = vmatprep.subr.bf16.mxu0 0
    %781 = vmatpush1.bf16.msra.mxu0 0
    %782 = vmatprep.subr.bf16.mxu0 0
    %783 = vmatpush1.bf16.msra.mxu0 0
    %784 = vmatprep.subr.bf16.mxu0 0
    %785 = vmatpush1.bf16.msra.mxu0 0
    %786 = vmatprep.subr.bf16.mxu0 0
    %787 = vmatpush1.bf16.msra.mxu0 0
    %788 = vmatprep.subr.bf16.mxu0 0
    %789 = vmatpush1.bf16.msra.mxu0 0
    %790 = vmatprep.mubr.bf16.mxu0 0
    %791 = vmatmul.mubr.bf16.gmra.mrb[0].mxu0 %v686
    %v792 = vpop.f32.mrb[0].mxu0
    %v793 = vadd.f32 %v708, %v792
    %v794 = vpop.f32.mrb[0].mxu0
    %v795 = vpop.f32.mrb[0].mxu0
    %v796 = vpop.f32.mrb[0].mxu0
    %797 = vdwg.mxu0
    %v798 = vpack.c.bf16 %v793, %v793
    %v801 = vunpack.c.l.s4 1966171168
    %v802 = vunpack.c.0.s8 %v801
    %v803 = vlaneseq
    %v804 = vshrl.u32 %v803, 7
    %v805 = vsub.s32 %v802, %v804
    %v806 = vrot.slane %v798, %v805
    %v807 = vcombine.high %v806, %v806
    %v809 = vunpack.c.l.s4 1966171168
    %v810 = vunpack.c.0.s8 %v809
    %v811 = vlaneseq
    %v812 = vshrl.u32 %v811, 7
    %v813 = vsub.s32 %v810, %v812
    %v814 = vrot.slane %v806, %v813
    %v816 = vunpack.c.l.s4 1966171168
    %v817 = vunpack.c.0.s8 %v816
    %v818 = vlaneseq
    %v819 = vshrl.u32 %v818, 7
    %v820 = vsub.s32 %v817, %v819
    %v821 = vrot.slane %v807, %v820
    %v822 = vcombine.high %v814, %v814
    %v823 = vcombine.high %v821, %v821
    %828 = vst [vmem:[#allocation2] sm:$0x1] %v814
    %829 = vst [vmem:[#allocation2 + $0x1] sm:$0x1] %v821
    %830 = vst [vmem:[#allocation2 + $0x2] sm:$0x1] %v822
    %831 = vst [vmem:[#allocation2 + $0x3] sm:$0x1] %v823
    // Predicated region
    $region22: #{mymodel_forward.1} parent=1 // pred_check
      _
    $region23: #{mymodel_forward.1} parent=1 // pred_check_branch
      %833 = sbr.rel (0) target = $region25
    $region24: #{mymodel_forward.1} parent=1 // pred_region
      // Predicated region
      $region26: #{mymodel_forward.1} parent=24 // pred_check
        _
      $region27: #{mymodel_forward.1} parent=24 // pred_check_branch
        %835 = sbr.rel (0) target = $region29
      $region28: #{mymodel_forward.1} parent=24 // pred_region
        // Predicated region
        $region30: #{mymodel_forward.1} parent=28 // pred_check
          _
        $region31: #{mymodel_forward.1} parent=28 // pred_check_branch
          %837 = sbr.rel target = $region33
        $region32: #{mymodel_forward.1} parent=28 // pred_region
          // Predicated region
          $region45: #{mymodel_forward.1} parent=32 // pred_check
            _
          $region46: #{mymodel_forward.1} parent=32 // pred_check_branch
            %852 = sbr.rel (0) target = $region48
          $region47: #{mymodel_forward.1} parent=32 // pred_region
            loop: start=0, step=1, limit=1
            $region49: #{mymodel_forward.1} parent=47 // loop_pre_header
              _
            $region50: #{mymodel_forward.1} parent=47 // loop_header
              %s855 = sphi 0, %s859
              %p856 = scmp.ge.s32.totalorder %s855, 1
              %s860 = sphi [#allocation2], [#allocation2]
              %s861 = sphi %s5, %s5
            $region51: #{mymodel_forward.1} parent=47 // loop_header_branch
              %858 = sbr.rel (%p856) target = $region55
            $region52: #{mymodel_forward.1} parent=47 // loop_body
              %v862 = vld [vmem:[%s860] sm:$0x1]
              %863 = vst [vmem:[%s861] sm:$0x1] %v862
            $region53: #{mymodel_forward.1} parent=47 // loop_footer
              %s859 = sadd.s32 1, %s855
            $region54: #{mymodel_forward.1} parent=47 // loop_footer_branch
              %854 = sbr.rel target = $region50
            $region55: #{mymodel_forward.1} parent=47 // loop_exit
              _
          $region48: #{mymodel_forward.1} parent=32 // pred_fallthru
            _
        $region33: #{mymodel_forward.1} parent=28 // pred_fallthru
          _
        // Predicated region
        $region34: #{mymodel_forward.1} parent=28 // pred_check
          _
        $region35: #{mymodel_forward.1} parent=28 // pred_check_branch
          %839 = sbr.rel (0) target = $region37
        $region36: #{mymodel_forward.1} parent=28 // pred_region
          loop: start=0, step=1, limit=1
          $region38: #{mymodel_forward.1} parent=36 // loop_pre_header
            _
          $region39: #{mymodel_forward.1} parent=36 // loop_header
            %s842 = sphi 0, %s846
            %p843 = scmp.ge.s32.totalorder %s842, 1
            %s847 = sphi [#allocation2], [#allocation2]
            %s848 = sphi %s5, %s5
          $region40: #{mymodel_forward.1} parent=36 // loop_header_branch
            %845 = sbr.rel (%p843) target = $region44
          $region41: #{mymodel_forward.1} parent=36 // loop_body
            %v849 = vld [vmem:[%s847] sm:$0x1]
            %850 = vst [vmem:[%s848] sm:$0x1] %v849
          $region42: #{mymodel_forward.1} parent=36 // loop_footer
            %s846 = sadd.s32 1, %s842
          $region43: #{mymodel_forward.1} parent=36 // loop_footer_branch
            %841 = sbr.rel target = $region39
          $region44: #{mymodel_forward.1} parent=36 // loop_exit
            _
        $region37: #{mymodel_forward.1} parent=28 // pred_fallthru
          _
      $region29: #{mymodel_forward.1} parent=24 // pred_fallthru
        _
      %864 = vnop
    $region25: #{mymodel_forward.1} parent=1 // pred_fallthru
      _
    // Predicated region
    $region56: #{mymodel_forward.1} parent=1 // pred_check
      _
    $region57: #{mymodel_forward.1} parent=1 // pred_check_branch
      %866 = sbr.rel (0) target = $region59
    $region58: #{mymodel_forward.1} parent=1 // pred_region
      _
    $region59: #{mymodel_forward.1} parent=1 // pred_fallthru
      _

</llo_original>
